<compile_context>
chip_gen: v6e
topology: v6e:2x2x1
jax: 0.10.0
libtpu: 0.0.40
codegen_flags: <defaults>
</compile_context>

<pallas_src>
import jax
import jax.numpy as jnp
from jax.experimental import pallas as pl
from jax.experimental.pallas import tpu as pltpu


def _round_up(n, m):
    return ((n + m - 1) // m) * m


def perceptron_kernel(p_ref, x_ref, o_ref):
    # p_ref: SMEM (3,)          -- [w0, w1, b]
    # x_ref: VMEM (16, TILE_L)  -- rows 0:8 = feature 0, rows 8:16 = feature 1
    # o_ref: VMEM (8,  TILE_L)
    w0 = p_ref[0]
    w1 = p_ref[1]
    b = p_ref[2]

    x0 = x_ref[0:8, :]           # (8, TILE_L) -- full sublane occupancy
    x1 = x_ref[8:16, :]          # (8, TILE_L)

    # Linear layer: pure VPU multiply-adds (no cross-lane reduction needed).
    z = w0 * x0 + w1 * x1 + b

    # Exact sigmoid with a single EUP op: sigmoid(z) = 0.5 * tanh(z/2) + 0.5
    o_ref[...] = 0.5 * jnp.tanh(0.5 * z) + 0.5


def _choose_tile(lanes, max_tile_l=64 * 1024, min_tile_l=1024):
    """Lane-tile (multiple of 128): multi-MB steps, but >=4 steps when large."""
    tile = min(max_tile_l, _round_up(max(lanes, 1), 128))
    # Prefer >= 4 grid steps (2 per v7x TensorCore) when shrinking the tile
    # still keeps each step well above the per-step pipeline overhead.
    while (tile >= 2 * min_tile_l and tile % 256 == 0
           and _round_up(lanes, tile) // tile < 4):
        tile //= 2
    return tile


def _perceptron_packed_call(params, x_packed, tile_l):
    """params: (3,) f32 [w0, w1, b]; x_packed: (16, L) f32 with L % tile_l == 0.
    Returns (8, L) f32 = sigmoid(w0*x0 + w1*x1 + b), same lane packing as x."""
    L = x_packed.shape[1]
    grid = (L // tile_l,)
    return pl.pallas_call(
        perceptron_kernel,
        out_shape=jax.ShapeDtypeStruct((8, L), jnp.float32),
        grid=grid,
        in_specs=[
            # Single tiny scalar operand in SMEM (no padded VMEM tiles).
            pl.BlockSpec(memory_space=pltpu.MemorySpace.SMEM),
            # (16, tile_l): sublanes fully used, lanes a multiple of 128.
            pl.BlockSpec((16, tile_l), lambda i: (0, i)),
        ],
        out_specs=pl.BlockSpec((8, tile_l), lambda i: (0, i)),
        compiler_params=pltpu.CompilerParams(
            dimension_semantics=("parallel",),      # megacore split on v7x
            vmem_limit_bytes=48 * 1024 * 1024,      # fits v5e/v6e/v7x budgets
        ),
    )(params, x_packed)


def perceptron_forward_packed(x_packed, weight, bias):
    """Fast path: x already feature-major + sublane-packed as (16, L), L % 128 == 0.
    Sample s = r * L + c lives at position (r, c) of rows 0:8 (feature 0) and
    rows 8:16 (feature 1).  Returns the lane-dense (8, L) sigmoid output."""
    L = x_packed.shape[1]
    tile_l = _choose_tile(L)
    while L % tile_l != 0:          # ensure the tile divides L exactly
        tile_l -= 128
    params = jnp.concatenate(
        [weight.reshape(-1), bias.reshape(-1)]).astype(jnp.float32)
    return _perceptron_packed_call(params, x_packed, tile_l)


@jax.jit
def perceptron_forward(x, weight, bias):
    """PyTorch-layout adapter: x (B, 2) f32 -> (B, 1) f32 = sigmoid(x @ W.T + b).

    The transpose / pad / reshape below are fused by XLA under this jit into a
    single re-layout pass; feed perceptron_forward_packed() directly to avoid
    even that when the producer can emit the feature-major packed layout.
    """
    B = x.shape[0]
    lanes = -(-B // 8)                       # samples per sublane row
    tile_l = _choose_tile(lanes)
    padded_l = _round_up(max(lanes, 1), tile_l)
    Bp = 8 * padded_l

    x_fm = x.astype(jnp.float32).T           # (2, B) feature-major
    if Bp != B:
        x_fm = jnp.pad(x_fm, ((0, 0), (0, Bp - B)))
    x_packed = x_fm.reshape(16, padded_l)    # rows 0:8 -> x0, rows 8:16 -> x1

    params = jnp.concatenate(
        [weight.reshape(-1), bias.reshape(-1)]).astype(jnp.float32)
    out_packed = _perceptron_packed_call(params, x_packed, tile_l)  # (8, padded_l)

    out_flat = out_packed.reshape(Bp)
    if Bp != B:
        out_flat = out_flat[:B]              # skip slice when already aligned
    return out_flat.reshape(B, 1)


if __name__ == "__main__":
    key = jax.random.PRNGKey(0)
    kx, kw, kb = jax.random.split(key, 3)

    B = 8
    x = jax.random.normal(kx, (B, 2), dtype=jnp.float32)

    # Deterministic init mimicking PyTorch nn.Linear default: U(-1/sqrt(in), 1/sqrt(in))
    bound = 1.0 / jnp.sqrt(2.0)
    weight = jax.random.uniform(kw, (1, 2), dtype=jnp.float32, minval=-bound, maxval=bound)
    bias = jax.random.uniform(kb, (1,), dtype=jnp.float32, minval=-bound, maxval=bound)

    out = perceptron_forward(x, weight, bias)
    out = jax.block_until_ready(out)

    # Reference check in plain JAX (exact sigmoid, tight tolerance).
    ref = jax.nn.sigmoid(x @ weight.T + bias)
    assert out.shape == (B, 1)
    assert jnp.allclose(out, ref, atol=1e-5, rtol=1e-5), (out, ref)

    print("KERNEL_OK")
</pallas_src>

<mosaic_0001>
module attributes {stable_mosaic.version = 11 : i64} {
  func.func @perceptron_kernel(%arg0: i32, %arg1: memref<3xf32, #tpu.memory_space<smem>>, %arg2: memref<16x128xf32, #tpu.memory_space<vmem>>, %arg3: memref<8x128xf32, #tpu.memory_space<vmem>>) attributes {dimension_semantics = [#tpu.dimension_semantics<parallel>], iteration_bounds = array<i64: 1>, scalar_prefetch = 0 : i64, scratch_operands = 0 : i64, tpu.core_type = #tpu.core_type<tc>, window_params = [{transform_indices = @transform_0, window_bounds = array<i64: 3>}, {transform_indices = @transform_1, window_bounds = array<i64: 16, 128>}, {transform_indices = @transform_2, window_bounds = array<i64: 8, 128>}]} {
    %c0 = arith.constant 0 : index
    %0 = memref.load %arg1[%c0] : memref<3xf32, #tpu.memory_space<smem>>
    %c1 = arith.constant 1 : index
    %1 = memref.load %arg1[%c1] : memref<3xf32, #tpu.memory_space<smem>>
    %c2 = arith.constant 2 : index
    %2 = memref.load %arg1[%c2] : memref<3xf32, #tpu.memory_space<smem>>
    %c0_0 = arith.constant 0 : index
    %c0_1 = arith.constant 0 : index
    %3 = vector.load %arg2[%c0_0, %c0_1] : memref<16x128xf32, #tpu.memory_space<vmem>>, vector<8x128xf32>
    %c8 = arith.constant 8 : index
    %c0_2 = arith.constant 0 : index
    %4 = vector.load %arg2[%c8, %c0_2] : memref<16x128xf32, #tpu.memory_space<vmem>>, vector<8x128xf32>
    %5 = vector.broadcast %0 : f32 to vector<8x128xf32>
    %6 = arith.mulf %5, %3 : vector<8x128xf32>
    %7 = vector.broadcast %1 : f32 to vector<8x128xf32>
    %8 = arith.mulf %7, %4 : vector<8x128xf32>
    %9 = arith.addf %6, %8 : vector<8x128xf32>
    %10 = vector.broadcast %2 : f32 to vector<8x128xf32>
    %11 = arith.addf %9, %10 : vector<8x128xf32>
    %cst = arith.constant 5.000000e-01 : f32
    %12 = vector.broadcast %cst : f32 to vector<8x128xf32>
    %13 = arith.mulf %12, %11 : vector<8x128xf32>
    %14 = math.tanh %13 : vector<8x128xf32>
    %cst_3 = arith.constant 5.000000e-01 : f32
    %15 = vector.broadcast %cst_3 : f32 to vector<8x128xf32>
    %16 = arith.mulf %15, %14 : vector<8x128xf32>
    %cst_4 = arith.constant 5.000000e-01 : f32
    %17 = vector.broadcast %cst_4 : f32 to vector<8x128xf32>
    %18 = arith.addf %16, %17 : vector<8x128xf32>
    %c0_5 = arith.constant 0 : index
    %c0_6 = arith.constant 0 : index
    %19 = vector.load %arg3[%c0_5, %c0_6] : memref<8x128xf32, #tpu.memory_space<vmem>>, vector<8x128xf32>
    tpu.vector_store %arg3[%c0_5, %c0_6], %18 {strides = array<i32>} : memref<8x128xf32, #tpu.memory_space<vmem>>, vector<8x128xf32>,
    return
  }
  func.func @transform_0(%arg0: i32) -> i32 {
    %c0_i32 = arith.constant 0 : i32
    %c0_i32_0 = arith.constant 0 : i32
    return %c0_i32 : i32
  }
  func.func @transform_1(%arg0: i32) -> (i32, i32) {
    %c0_i32 = arith.constant 0 : i32
    %c0_i32_0 = arith.constant 0 : i32
    return %c0_i32, %arg0 : i32, i32
  }
  func.func @transform_2(%arg0: i32) -> (i32, i32) {
    %c0_i32 = arith.constant 0 : i32
    %c0_i32_0 = arith.constant 0 : i32
    return %c0_i32, %arg0 : i32, i32
  }
}

</mosaic_0001>

<llo_original>
// kernel: perceptron_forward.1
$region0: #{perceptron_forward.1}
  #allocation0 [shape = 'u32[]', space=smem, size = 0x4, offset = 0x4, fixed_abs, tag = 'smem constant byte address 0x4 - core index']
  #allocation1 [shape = 'u32[144,128]{1,0:T(1,128)}', space=vmem, size = 0x12000, scoped, tag = 'internal scratch']
  %s0 = inlined_call_operand.vmem [shape: f32[3], index: 0, kind: input, shape index: {}]
  %s1 = inlined_call_operand.vmem [shape: f32[16,128], index: 1, kind: input, shape index: {}]
  %s2 = inlined_call_operand.vmem [shape: f32[8,128], index: 2, kind: output, shape index: {}]
  %s3 = sld [smem:[#allocation0]]
  $region22: #{perceptron_forward.1} parent=0
    _
  %s5 = ssub.s32 1, %s3
  %s6 = scalar_select 0, %s5, %s3
  $region1: #{perceptron_forward.1} parent=0
    #allocation2 [shape = 'u8[512]{0}', space=smem, size = 0x200, scoped, tag = 'input window, operand 0, single buffered']
    #allocation3 [shape = 's32[1]{0}', space=sflag, size = 0x4, scoped, tag = 'scoped memory for perceptron_forward.1']
    %7 = vsyncpa [#allocation3], 0
    // Predicated region
    $region2: #{perceptron_forward.1} parent=1 // pred_check
      _
    $region3: #{perceptron_forward.1} parent=1 // pred_check_branch
      %9 = sbr.rel (0) target = $region5
    $region4: #{perceptron_forward.1} parent=1 // pred_region
      %s11 = ssub.s32 16, 16
      %12 = vsyncadd [#allocation3], %s11
      %s14 = sshll.u32 %s0, 4
      %s15 = int_to_ptr.vmem [resolvable:$true] %s14
      %17 = dma.vmem_to_smem %s15, 16, [#allocation2], [#allocation3]
    $region5: #{perceptron_forward.1} parent=1 // pred_fallthru
      _
    // Predicated region
    $region6: #{perceptron_forward.1} parent=1 // pred_check
      _
    $region7: #{perceptron_forward.1} parent=1 // pred_check_branch
      %19 = sbr.rel (0) target = $region9
    $region8: #{perceptron_forward.1} parent=1 // pred_region
      _
    $region9: #{perceptron_forward.1} parent=1 // pred_fallthru
      _
    // Predicated region
    $region10: #{perceptron_forward.1} parent=1 // pred_check
      _
    $region11: #{perceptron_forward.1} parent=1 // pred_check_branch
      %21 = sbr.rel (0) target = $region13
    $region12: #{perceptron_forward.1} parent=1 // pred_region
      %22 = dma.done [#allocation3], 16
    $region13: #{perceptron_forward.1} parent=1 // pred_fallthru
      _
    %23 = sfence
    %s24 = sld [smem:[#allocation2]]
    %s25 = sld [smem:[#allocation2 + $0x1]]
    %s26 = sld [smem:[#allocation2 + $0x2]]
    %v27 = vld [vmem:[%s1] sm:$0xff]
    %v28 = vld [vmem:[%s1 + $0x8] sm:$0xff]
    %v29 = vstv %s24
    %v30 = vmul.f32 %v29, %v27
    %v31 = vstv %s25
    %v32 = vmul.f32 %v31, %v28
    %v33 = vadd.f32 %v30, %v32
    %v34 = vstv %s26
    %v35 = vadd.f32 %v33, %v34
    %v36 = vmul.f32 %v35, 0.5
    %v37 = vtanh.pop %v36
    %v38 = vmul.f32 %v37, 0.5
    %v39 = vadd.f32 %v38, 0.5
    %40 = vst [vmem:[%s2] sm:$0xff] %v39
    // Predicated region
    $region14: #{perceptron_forward.1} parent=1 // pred_check
      _
    $region15: #{perceptron_forward.1} parent=1 // pred_check_branch
      %42 = sbr.rel (0) target = $region17
    $region16: #{perceptron_forward.1} parent=1 // pred_region
      _
    $region17: #{perceptron_forward.1} parent=1 // pred_fallthru
      _
    // Predicated region
    $region18: #{perceptron_forward.1} parent=1 // pred_check
      _
    $region19: #{perceptron_forward.1} parent=1 // pred_check_branch
      %44 = sbr.rel (0) target = $region21
    $region20: #{perceptron_forward.1} parent=1 // pred_region
      _
    $region21: #{perceptron_forward.1} parent=1 // pred_fallthru
      _
    %45 = vsyncpa [#allocation3], 1

</llo_original>
